<compile_context>
chip_gen: v5e
topology: v5e:2x2
jax: 0.10.0
libtpu: 0.0.40
codegen_flags: <defaults>
</compile_context>

<pallas_src>
import jax
import jax.numpy as jnp
from jax.experimental import pallas as pl
from jax.experimental.pallas import tpu as pltpu

BN_EPS = 1e-5


def transform_kernel(x_ref, w_ref, o_ref):
    # x_ref: [B, D_in] bf16, w_ref: [D_in, D_out] bf16 (VMEM-resident across grid),
    # o_ref: [B, D_out] f32.
    # Linear (MXU, f32 accumulate).
    y = jnp.dot(x_ref[...], w_ref[...], preferred_element_type=jnp.float32)

    # BatchNorm1d, training-mode stats over this chunk's batch, one pass.
    inv_b = 1.0 / y.shape[0]
    s = jnp.sum(y, axis=0, keepdims=True)
    ss = jnp.sum(y * y, axis=0, keepdims=True)
    mean = s * inv_b
    var = jnp.maximum(ss * inv_b - mean * mean, 0.0)   # clamp: no NaN from cancellation
    y = (y - mean) * jax.lax.rsqrt(var + BN_EPS)

    # Tanh activation (EUP).  Dropout is identity in eval mode.
    o_ref[...] = jnp.tanh(y).astype(o_ref.dtype)


@jax.jit
def transform_net_forward(x, w):
    """TransformNet forward.

    x: [B, D_in] (single module call) or [G, B, D_in] (G independent calls fused
       into one launch; BN statistics are computed per chunk g, matching G
       separate PyTorch forward calls).
    w: [D_in, D_out]  (fc1.weight transposed).
    Returns f32 output of shape [B, D_out] or [G, B, D_out].
    """
    squeeze = x.ndim == 2
    if squeeze:
        x = x[None]
    G, B, D_in = x.shape
    D_out = w.shape[1]

    # Cast matmul operands to bf16 at the call boundary (post-matmul math stays f32).
    x_bf = x.astype(jnp.bfloat16)
    w_bf = w.astype(jnp.bfloat16)

    cost = pl.CostEstimate(
        flops=2 * G * B * D_in * D_out,
        transcendentals=G * (B * D_out + D_out),           # tanh + per-feature rsqrt
        bytes_accessed=G * B * D_in * 2 + D_in * D_out * 2 + G * B * D_out * 4,
    )

    out = pl.pallas_call(
        transform_kernel,
        out_shape=jax.ShapeDtypeStruct((G, B, D_out), jnp.float32),
        grid=(G,),
        in_specs=[
            # x: streamed per grid step (double-buffered).
            pl.BlockSpec((None, B, D_in), lambda g: (g, 0, 0)),
            # w: same block every step -> fetched once, stays VMEM-resident.
            pl.BlockSpec((D_in, D_out), lambda g: (0, 0)),
        ],
        out_specs=pl.BlockSpec((None, B, D_out), lambda g: (g, 0, 0)),
        compiler_params=pltpu.CompilerParams(
            dimension_semantics=("parallel",),
        ),
        cost_estimate=cost,
    )(x_bf, w_bf)

    return out[0] if squeeze else out


def xavier_uniform(key, fan_in, fan_out, dtype=jnp.float32):
    # Matches torch.nn.init.xavier_uniform_ bound: sqrt(6 / (fan_in + fan_out)).
    limit = (6.0 / (fan_in + fan_out)) ** 0.5
    return jax.random.uniform(
        key, (fan_in, fan_out), dtype=dtype, minval=-limit, maxval=limit
    )


def reference_forward(x, w, b):
    # Mirrors the kernel numerics: bf16 matmul operands, f32 accumulate/BN/tanh.
    y = jnp.dot(
        x.astype(jnp.bfloat16), w.astype(jnp.bfloat16),
        preferred_element_type=jnp.float32,
    ) + b
    mean = jnp.mean(y, axis=-2, keepdims=True)
    var = jnp.mean((y - mean) ** 2, axis=-2, keepdims=True)
    y = (y - mean) * jax.lax.rsqrt(var + BN_EPS)
    return jnp.tanh(y)


if __name__ == "__main__":
    # Shapes consistent with the module: fc_input_size=32,
    # opt.text_mapping_layers[1]=256.  G=4 fused batch chunks of 128 rows each.
    D_IN, D_OUT = 32, 256
    G, B = 4, 128

    key = jax.random.PRNGKey(0)
    kx, kw, kx2 = jax.random.split(key, 3)

    w = xavier_uniform(kw, D_IN, D_OUT)           # fc1.weight (transposed layout)
    b = jnp.zeros((D_OUT,), dtype=jnp.float32)    # fc1.bias (zeros; cancels under BN)

    # Multi-chunk path (grid-amortized launch).
    x3 = jax.random.normal(kx, (G, B, D_IN), dtype=jnp.float32)
    out3 = jax.block_until_ready(transform_net_forward(x3, w))
    ref3 = reference_forward(x3, w, b)
    assert out3.shape == (G, B, D_OUT)
    assert jnp.allclose(out3, ref3, atol=1e-3, rtol=1e-3), "multi-chunk mismatch"

    # Single-batch path (original module-sized call, B=8).
    x2 = jax.random.normal(kx2, (8, D_IN), dtype=jnp.float32)
    out2 = jax.block_until_ready(transform_net_forward(x2, w))
    ref2 = reference_forward(x2, w, b)
    assert out2.shape == (8, D_OUT)
    assert jnp.allclose(out2, ref2, atol=1e-3, rtol=1e-3), "single-batch mismatch"

    print("KERNEL_OK")
</pallas_src>

<mosaic_0001>
module attributes {stable_mosaic.version = 11 : i64} {
  func.func @transform_kernel(%arg0: i32, %arg1: memref<1x128x32xbf16, #tpu.memory_space<vmem>>, %arg2: memref<32x256xbf16, #tpu.memory_space<vmem>>, %arg3: memref<1x128x256xf32, #tpu.memory_space<vmem>>) attributes {dimension_semantics = [#tpu.dimension_semantics<parallel>], iteration_bounds = array<i64: 4>, scalar_prefetch = 0 : i64, scratch_operands = 0 : i64, tpu.core_type = #tpu.core_type<tc>, window_params = [{transform_indices = @transform_0, window_bounds = array<i64: 1, 128, 32>}, {pipeline_mode = #tpu.pipeline_mode<synchronous>, transform_indices = @transform_1, window_bounds = array<i64: 32, 256>}, {transform_indices = @transform_2, window_bounds = array<i64: 1, 128, 256>}]} {
    %c0 = arith.constant 0 : index
    %c0_0 = arith.constant 0 : index
    %c0_1 = arith.constant 0 : index
    %0 = vector.load %arg1[%c0, %c0_0, %c0_1] : memref<1x128x32xbf16, #tpu.memory_space<vmem>>, vector<1x128x32xbf16>
    %1 = vector.shape_cast %0 : vector<1x128x32xbf16> to vector<128x32xbf16>
    %c0_2 = arith.constant 0 : index
    %c0_3 = arith.constant 0 : index
    %2 = vector.load %arg2[%c0_2, %c0_3] : memref<32x256xbf16, #tpu.memory_space<vmem>>, vector<32x256xbf16>
    %cst = arith.constant dense<0.000000e+00> : vector<128x256xf32>
    %3 = tpu.matmul %1, %2, %cst {dimension_numbers = #tpu.dot_dimension_numbers<[1], [0], [0], [1], [0, 0, 1, 1], [], []>} : vector<128x32xbf16>, vector<32x256xbf16>, vector<128x256xf32> -> vector<128x256xf32>
    %cst_4 = arith.constant dense<0.000000e+00> : vector<256xf32>
    %4 = vector.multi_reduction <add>, %3, %cst_4 [0] : vector<128x256xf32> to vector<256xf32>
    %5 = vector.shape_cast %4 : vector<256xf32> to vector<1x256xf32>
    %6 = arith.mulf %3, %3 : vector<128x256xf32>
    %cst_5 = arith.constant dense<0.000000e+00> : vector<256xf32>
    %7 = vector.multi_reduction <add>, %6, %cst_5 [0] : vector<128x256xf32> to vector<256xf32>
    %8 = vector.shape_cast %7 : vector<256xf32> to vector<1x256xf32>
    %cst_6 = arith.constant 7.812500e-03 : f32
    %9 = vector.broadcast %cst_6 : f32 to vector<1x256xf32>
    %10 = arith.mulf %5, %9 : vector<1x256xf32>
    %cst_7 = arith.constant 7.812500e-03 : f32
    %11 = vector.broadcast %cst_7 : f32 to vector<1x256xf32>
    %12 = arith.mulf %8, %11 : vector<1x256xf32>
    %13 = arith.mulf %10, %10 : vector<1x256xf32>
    %14 = arith.subf %12, %13 : vector<1x256xf32>
    %cst_8 = arith.constant 0.000000e+00 : f32
    %15 = vector.broadcast %cst_8 : f32 to vector<1x256xf32>
    %16 = arith.maximumf %14, %15 : vector<1x256xf32>
    %17 = vector.broadcast %10 : vector<1x256xf32> to vector<128x256xf32>
    %18 = arith.subf %3, %17 : vector<128x256xf32>
    %cst_9 = arith.constant 9.99999974E-6 : f32
    %19 = vector.broadcast %cst_9 : f32 to vector<1x256xf32>
    %20 = arith.addf %16, %19 : vector<1x256xf32>
    %21 = math.rsqrt %20 : vector<1x256xf32>
    %22 = vector.broadcast %21 : vector<1x256xf32> to vector<128x256xf32>
    %23 = arith.mulf %18, %22 : vector<128x256xf32>
    %24 = math.tanh %23 : vector<128x256xf32>
    %c0_10 = arith.constant 0 : index
    %c0_11 = arith.constant 0 : index
    %c0_12 = arith.constant 0 : index
    %25 = vector.load %arg3[%c0_10, %c0_11, %c0_12] : memref<1x128x256xf32, #tpu.memory_space<vmem>>, vector<1x128x256xf32>
    %26 = vector.shape_cast %25 : vector<1x128x256xf32> to vector<128x256xf32>
    %27 = vector.shape_cast %24 : vector<128x256xf32> to vector<1x128x256xf32>
    tpu.vector_store %arg3[%c0_10, %c0_11, %c0_12], %27 {strides = array<i32>} : memref<1x128x256xf32, #tpu.memory_space<vmem>>, vector<1x128x256xf32>,
    return
  }
  func.func @transform_0(%arg0: i32) -> (i32, i32, i32) {
    %c0_i32 = arith.constant 0 : i32
    %c0_i32_0 = arith.constant 0 : i32
    %c0_i32_1 = arith.constant 0 : i32
    return %arg0, %c0_i32, %c0_i32_0 : i32, i32, i32
  }
  func.func @transform_1(%arg0: i32) -> (i32, i32) {
    %c0_i32 = arith.constant 0 : i32
    %c0_i32_0 = arith.constant 0 : i32
    %c0_i32_1 = arith.constant 0 : i32
    return %c0_i32, %c0_i32_0 : i32, i32
  }
  func.func @transform_2(%arg0: i32) -> (i32, i32, i32) {
    %c0_i32 = arith.constant 0 : i32
    %c0_i32_0 = arith.constant 0 : i32
    %c0_i32_1 = arith.constant 0 : i32
    return %arg0, %c0_i32, %c0_i32_0 : i32, i32, i32
  }
}

</mosaic_0001>

<llo_original>
// kernel: transform_net_forward.1
$region0: #{transform_net_forward.1}
  #allocation0 [shape = 'u32[]', space=smem, size = 0x4, offset = 0x4, fixed_abs, tag = 'smem constant byte address 0x4 - core index']
  #allocation1 [shape = 'u32[72,128]{1,0:T(1,128)}', space=vmem, size = 0x9000, scoped, tag = 'internal scratch']
  %s0 = inlined_call_operand.vmem [shape: bf16[4,128,32], index: 0, kind: input, shape index: {}]
  %s1 = inlined_call_operand.vmem [shape: bf16[32,256], index: 1, kind: input, shape index: {}]
  %s2 = inlined_call_operand.hbm [shape: f32[4,128,256], index: 2, kind: output, shape index: {}]
  %s3 = sld [smem:[#allocation0]]
  $region41: #{transform_net_forward.1} parent=0
    _
  %s5 = ssub.s32 1, %s3
  %s6 = scalar_select 0, %s5, %s3
  $region1: #{transform_net_forward.1} parent=0
    #allocation2 [shape = 'u8[262144]{0}', space=vmem, size = 0x40000, scoped, tag = 'output window, operand 0']
    #allocation3 [shape = 's32[2]{0}', space=sflag, size = 0x8, scoped, tag = 'scoped memory for transform_net_forward.1']
    %7 = vsyncpa [#allocation3], 0
    %s8 = scalar_lea.sflag [#allocation3], 1
    %9 = vsyncpa %s8, 0
    loop: start=0, step=1, limit=6
    $region2: #{transform_net_forward.1} parent=1 // loop_pre_header
      _
    $region3: #{transform_net_forward.1} parent=1 // loop_header
      %s11 = sphi 0, %s15
      %p12 = scmp.ge.s32.totalorder %s11, 6
      %s21 = sphi 0, %s23
      %s24 = sphi 0, %s21
      %s25 = sphi 0, %s24
      %s41 = sphi 0, %s25
      %s45 = sphi 0, %s45
      %s47 = sphi 0, %s45
      %s48 = sphi 0, %s47
      %s62 = sphi 0, %s48
      %s68 = sphi 0, %s70
      %s71 = sphi 0, %s68
      %s72 = sphi 0, %s71
      %s88 = sphi 0, %s72
    $region4: #{transform_net_forward.1} parent=1 // loop_header_branch
      %14 = sbr.rel (%p12) target = $region8
    $region5: #{transform_net_forward.1} parent=1 // loop_body
      %s16 = ssub.s32 %s11, 1
      %s17 = ssub.s32 %s11, 2
      %s18 = sadd.s32 %s11, 1
      %s19 = ssub.s32 %s11, %s18
      %p20 = scmp.eq.s32.totalorder %s19, 0
      %s22 = sadd.s32 %s21, 1
      %s23 = scalar_select %p20, %s21, %s22
      %p26 = pneg %p20
      %p27 = scmp.eq.s32.totalorder %s11, 3
      %p28 = por %p26, %p27
      %p29 = scmp.ne.s32.totalorder %s21, %s24
      %p30 = scmp.eq.s32.totalorder %s11, 0
      %p31 = por %p29, %p30
      %p32 = scmp.ne.s32.totalorder %s21, %s24
      %p33 = scmp.eq.s32.totalorder %s16, 3
      %p34 = por %p32, %p33
      %p35 = scmp.ne.s32.totalorder %s24, %s25
      %p36 = scmp.eq.s32.totalorder %s16, 0
      %p37 = por %p35, %p36
      %p38 = scmp.ne.s32.totalorder %s24, %s25
      %p39 = scmp.eq.s32.totalorder %s17, 3
      %p40 = por %p38, %p39
      %p42 = scmp.ne.s32.totalorder %s25, %s41
      %p43 = scmp.eq.s32.totalorder %s17, 0
      %p44 = por %p42, %p43
      %s46 = sadd.s32 %s45, 1
      %p49 = scmp.eq.s32.totalorder %s11, 3
      %p50 = scmp.ne.s32.totalorder %s45, %s47
      %p51 = scmp.eq.s32.totalorder %s11, 0
      %p52 = por %p50, %p51
      %p53 = scmp.ne.s32.totalorder %s45, %s47
      %p54 = scmp.eq.s32.totalorder %s16, 3
      %p55 = por %p53, %p54
      %p56 = scmp.ne.s32.totalorder %s47, %s48
      %p57 = scmp.eq.s32.totalorder %s16, 0
      %p58 = por %p56, %p57
      %p59 = scmp.ne.s32.totalorder %s47, %s48
      %p60 = scmp.eq.s32.totalorder %s17, 3
      %p61 = por %p59, %p60
      %p63 = scmp.ne.s32.totalorder %s48, %s62
      %p64 = scmp.eq.s32.totalorder %s17, 0
      %p65 = por %p63, %p64
      %s66 = ssub.s32 %s11, %s18
      %p67 = scmp.eq.s32.totalorder %s66, 0
      %s69 = sadd.s32 %s68, 1
      %s70 = scalar_select %p67, %s68, %s69
      %p73 = pneg %p67
      %p74 = scmp.eq.s32.totalorder %s11, 3
      %p75 = por %p73, %p74
      %p76 = scmp.ne.s32.totalorder %s68, %s71
      %p77 = scmp.eq.s32.totalorder %s11, 0
      %p78 = por %p76, %p77
      %p79 = scmp.ne.s32.totalorder %s68, %s71
      %p80 = scmp.eq.s32.totalorder %s16, 3
      %p81 = por %p79, %p80
      %p82 = scmp.ne.s32.totalorder %s71, %s72
      %p83 = scmp.eq.s32.totalorder %s16, 0
      %p84 = por %p82, %p83
      %p85 = scmp.ne.s32.totalorder %s71, %s72
      %p86 = scmp.eq.s32.totalorder %s17, 3
      %p87 = por %p85, %p86
      %p89 = scmp.ne.s32.totalorder %s72, %s88
      %p90 = scmp.eq.s32.totalorder %s17, 0
      %p91 = por %p89, %p90
      %p92 = scmp.le.s32.totalorder 1, %s11
      %p93 = scmp.lt.s32.totalorder %s11, 5
      %p94 = pnand %p92, %p93
      %p95 = pneg %p94
      // Predicated region
      $region9: #{transform_net_forward.1} parent=5 // pred_check
        _
      $region10: #{transform_net_forward.1} parent=5 // pred_check_branch
        %97 = sbr.rel (%p94) target = $region12
      $region11: #{transform_net_forward.1} parent=5 // pred_region
        %s98 = ssub.s32 %s11, 1
        // Predicated region
        $region13: #{transform_net_forward.1} parent=11 // pred_check
          %p99 = pneg %p58
        $region14: #{transform_net_forward.1} parent=11 // pred_check_branch
          %101 = sbr.rel (%p99) target = $region16
        $region15: #{transform_net_forward.1} parent=11 // pred_region
          _
        $region16: #{transform_net_forward.1} parent=11 // pred_fallthru
          _
      $region12: #{transform_net_forward.1} parent=5 // pred_fallthru
        _
      %p102 = scmp.lt.s32.totalorder %s11, 4
      // Predicated region
      $region17: #{transform_net_forward.1} parent=5 // pred_check
        %p103 = pneg %p102
      $region18: #{transform_net_forward.1} parent=5 // pred_check_branch
        %105 = sbr.rel (%p103) target = $region20
      $region19: #{transform_net_forward.1} parent=5 // pred_region
        // Predicated region
        $region21: #{transform_net_forward.1} parent=19 // pred_check
          %p106 = pneg %p31
        $region22: #{transform_net_forward.1} parent=19 // pred_check_branch
          %108 = sbr.rel (%p106) target = $region24
        $region23: #{transform_net_forward.1} parent=19 // pred_region
          %p109 = scmp.lt.s32.totalorder %s11, 3
          %s110 = scalar_select %p109, %s11, 3
          %s111 = smul.addr %s110, 16
          %s112 = smul.addr %s111, 4
          %s113 = scalar_lea.vmem %s0, %s112
        $region24: #{transform_net_forward.1} parent=19 // pred_fallthru
          _
      $region20: #{transform_net_forward.1} parent=5 // pred_fallthru
        _
      %p114 = scmp.le.s32.totalorder 1, %s11
      %p115 = scmp.lt.s32.totalorder %s11, 5
      %p116 = pnand %p114, %p115
      %p117 = pneg %p116
      // Predicated region
      $region25: #{transform_net_forward.1} parent=5 // pred_check
        _
      $region26: #{transform_net_forward.1} parent=5 // pred_check_branch
        %119 = sbr.rel (%p116) target = $region28
      $region27: #{transform_net_forward.1} parent=5 // pred_region
        %s120 = ssub.s32 %s11, 1
        %p121 = scmp.lt.s32.totalorder %s16, 3
        %s122 = scalar_select %p121, %s16, 3
        %s123 = smul.addr %s122, 16
        %s124 = smul.addr %s123, 4
        %s125 = scalar_lea.vmem %s0, %s124
        %p126 = pneg %p37
        %p127 = pneg %p34
        %p128 = pneg %p58
        %p129 = pneg %p55
        %p130 = pneg %p84
        %p131 = pneg %p81
        %s132 = sand.u32 %s71, 1
        %s133 = scalar_lea.sflag [#allocation3], %s132
        %s134 = sand.u32 %s71, 1
        %s135 = smul.addr %s134, 256
        %s136 = scalar_lea.vmem [#allocation2], %s135
        %p137 = scmp.lt.s32.totalorder %s16, 3
        %s138 = scalar_select %p137, %s16, 3
        %s139 = smul.addr %s138, 16
        %s140 = smul.addr %s139, 4
        %s141 = scalar_lea.vmem %s0, %s140
        %v143 = vld [vmem:[%s141] sm:$0xf]
        %v144 = vld [vmem:[%s141 + $0x4] sm:$0xf]
        %v145 = vld [vmem:[%s141 + $0x8] sm:$0xf]
        %v146 = vld [vmem:[%s141 + $0xc] sm:$0xf]
        %v147 = vld [vmem:[%s141 + $0x10] sm:$0xf]
        %v148 = vld [vmem:[%s141 + $0x14] sm:$0xf]
        %v149 = vld [vmem:[%s141 + $0x18] sm:$0xf]
        %v150 = vld [vmem:[%s141 + $0x1c] sm:$0xf]
        %v151 = vld [vmem:[%s141 + $0x20] sm:$0xf]
        %v152 = vld [vmem:[%s141 + $0x24] sm:$0xf]
        %v153 = vld [vmem:[%s141 + $0x28] sm:$0xf]
        %v154 = vld [vmem:[%s141 + $0x2c] sm:$0xf]
        %v155 = vld [vmem:[%s141 + $0x30] sm:$0xf]
        %v156 = vld [vmem:[%s141 + $0x34] sm:$0xf]
        %v157 = vld [vmem:[%s141 + $0x38] sm:$0xf]
        %v158 = vld [vmem:[%s141 + $0x3c] sm:$0xf]
        %v159 = vld [vmem:[%s1] sm:$0xff]
        %v160 = vld [vmem:[%s1 + $0x8] sm:$0xff]
        %v161 = vld [vmem:[%s1 + $0x10] sm:$0xff]
        %v162 = vld [vmem:[%s1 + $0x18] sm:$0xff]
        %v179 = vunpack.c.l.b16 %v143
        %v180 = vunpack.c.l.b16 %v144
        %v181 = vunpack.c.l.b16 %v145
        %v182 = vunpack.c.l.b16 %v146
        %v183 = vunpack.c.l.b16 %v147
        %v184 = vunpack.c.l.b16 %v148
        %v185 = vunpack.c.l.b16 %v149
        %v186 = vunpack.c.l.b16 %v150
        %v187 = vunpack.c.l.b16 %v151
        %v188 = vunpack.c.l.b16 %v152
        %v189 = vunpack.c.l.b16 %v153
        %v190 = vunpack.c.l.b16 %v154
        %v191 = vunpack.c.l.b16 %v155
        %v192 = vunpack.c.l.b16 %v156
        %v193 = vunpack.c.l.b16 %v157
        %v194 = vunpack.c.l.b16 %v158
        %v195 = vpack.c.b16 %v180, %v179
        %v196 = vpack.c.b16 %v182, %v181
        %v197 = vpack.c.b16 %v184, %v183
        %v198 = vpack.c.b16 %v186, %v185
        %v199 = vpack.c.b16 %v188, %v187
        %v200 = vpack.c.b16 %v190, %v189
        %v201 = vpack.c.b16 %v192, %v191
        %v202 = vpack.c.b16 %v194, %v193
        %v207 = vunpack.c.l.b16 %v159
        %v208 = vunpack.c.h.b16 %v159
        %v209 = vunpack.c.l.b16 %v160
        %v210 = vunpack.c.h.b16 %v160
        %v211 = vunpack.c.l.b16 %v161
        %v212 = vunpack.c.h.b16 %v161
        %v213 = vunpack.c.l.b16 %v162
        %v214 = vunpack.c.h.b16 %v162
        %v215 = vpack.c.b16 %v209, %v207
        %v216 = vpack.c.b16 %v210, %v208
        %v217 = vpack.c.b16 %v213, %v211
        %v218 = vpack.c.b16 %v214, %v212
        %vm223 = vcmask 261120
        %v225 = vsel %vm223, %v195, 0
        %v228 = vsel %vm223, %v196, 0
        %v231 = vsel %vm223, %v197, 0
        %v234 = vsel %vm223, %v198, 0
        %v237 = vsel %vm223, %v199, 0
        %v240 = vsel %vm223, %v200, 0
        %v243 = vsel %vm223, %v201, 0
        %v246 = vsel %vm223, %v202, 0
        %248 = vmatpush.bf16.msra.mxu0 0
        %249 = vmatpush.bf16.msra.mxu0 0
        %250 = vmatpush.bf16.msra.mxu0 0
        %251 = vmatpush.bf16.msra.mxu0 0
        %252 = vmatpush.bf16.msra.mxu0 0
        %253 = vmatpush.bf16.msra.mxu0 0
        %254 = vmatpush.bf16.msra.mxu0 %v217
        %255 = vmatpush.bf16.msra.mxu0 %v215
        %256 = vmatmul.bf16.gmra.mxu0 %v225
        %v257 = vpop.f32.mrf.mxu0
        %v258 = vadd.f32 0.0, %v257
        %v259 = vpop.f32.mrf.mxu0
        %v260 = vadd.f32 0.0, %v259
        %261 = vmatmul.bf16.gmra.mxu0 %v228
        %v262 = vpop.f32.mrf.mxu0
        %v263 = vadd.f32 0.0, %v262
        %v264 = vpop.f32.mrf.mxu0
        %v265 = vadd.f32 0.0, %v264
        %266 = vmatmul.bf16.gmra.mxu0 %v231
        %v267 = vpop.f32.mrf.mxu0
        %v268 = vadd.f32 0.0, %v267
        %v269 = vpop.f32.mrf.mxu0
        %v270 = vadd.f32 0.0, %v269
        %271 = vmatmul.bf16.gmra.mxu0 %v234
        %v272 = vpop.f32.mrf.mxu0
        %v273 = vadd.f32 0.0, %v272
        %v274 = vpop.f32.mrf.mxu0
        %v275 = vadd.f32 0.0, %v274
        %276 = vmatmul.bf16.gmra.mxu0 %v237
        %v277 = vpop.f32.mrf.mxu0
        %v278 = vadd.f32 0.0, %v277
        %v279 = vpop.f32.mrf.mxu0
        %v280 = vadd.f32 0.0, %v279
        %281 = vmatmul.bf16.gmra.mxu0 %v240
        %v282 = vpop.f32.mrf.mxu0
        %v283 = vadd.f32 0.0, %v282
        %v284 = vpop.f32.mrf.mxu0
        %v285 = vadd.f32 0.0, %v284
        %286 = vmatmul.bf16.gmra.mxu0 %v243
        %v287 = vpop.f32.mrf.mxu0
        %v288 = vadd.f32 0.0, %v287
        %v289 = vpop.f32.mrf.mxu0
        %v290 = vadd.f32 0.0, %v289
        %291 = vmatmul.bf16.gmra.mxu0 %v246
        %v292 = vpop.f32.mrf.mxu0
        %v293 = vadd.f32 0.0, %v292
        %v294 = vpop.f32.mrf.mxu0
        %v295 = vadd.f32 0.0, %v294
        %296 = vdwg.mxu0
        %297 = vmatpush.bf16.msra.mxu0 0
        %298 = vmatpush.bf16.msra.mxu0 0
        %299 = vmatpush.bf16.msra.mxu0 0
        %300 = vmatpush.bf16.msra.mxu0 0
        %301 = vmatpush.bf16.msra.mxu0 0
        %302 = vmatpush.bf16.msra.mxu0 0
        %303 = vmatpush.bf16.msra.mxu0 %v218
        %304 = vmatpush.bf16.msra.mxu0 %v216
        %305 = vmatmul.bf16.gmra.mxu0 %v225
        %v306 = vpop.f32.mrf.mxu0
        %v307 = vadd.f32 0.0, %v306
        %v308 = vpop.f32.mrf.mxu0
        %v309 = vadd.f32 0.0, %v308
        %310 = vmatmul.bf16.gmra.mxu0 %v228
        %v311 = vpop.f32.mrf.mxu0
        %v312 = vadd.f32 0.0, %v311
        %v313 = vpop.f32.mrf.mxu0
        %v314 = vadd.f32 0.0, %v313
        %315 = vmatmul.bf16.gmra.mxu0 %v231
        %v316 = vpop.f32.mrf.mxu0
        %v317 = vadd.f32 0.0, %v316
        %v318 = vpop.f32.mrf.mxu0
        %v319 = vadd.f32 0.0, %v318
        %320 = vmatmul.bf16.gmra.mxu0 %v234
        %v321 = vpop.f32.mrf.mxu0
        %v322 = vadd.f32 0.0, %v321
        %v323 = vpop.f32.mrf.mxu0
        %v324 = vadd.f32 0.0, %v323
        %325 = vmatmul.bf16.gmra.mxu0 %v237
        %v326 = vpop.f32.mrf.mxu0
        %v327 = vadd.f32 0.0, %v326
        %v328 = vpop.f32.mrf.mxu0
        %v329 = vadd.f32 0.0, %v328
        %330 = vmatmul.bf16.gmra.mxu0 %v240
        %v331 = vpop.f32.mrf.mxu0
        %v332 = vadd.f32 0.0, %v331
        %v333 = vpop.f32.mrf.mxu0
        %v334 = vadd.f32 0.0, %v333
        %335 = vmatmul.bf16.gmra.mxu0 %v243
        %v336 = vpop.f32.mrf.mxu0
        %v337 = vadd.f32 0.0, %v336
        %v338 = vpop.f32.mrf.mxu0
        %v339 = vadd.f32 0.0, %v338
        %340 = vmatmul.bf16.gmra.mxu0 %v246
        %v341 = vpop.f32.mrf.mxu0
        %v342 = vadd.f32 0.0, %v341
        %v343 = vpop.f32.mrf.mxu0
        %v344 = vadd.f32 0.0, %v343
        %345 = vdwg.mxu0
        %v346 = vadd.f32 %v258, %v260
        %v347 = vadd.f32 %v346, %v263
        %v348 = vadd.f32 %v347, %v265
        %v349 = vadd.f32 %v348, %v268
        %v350 = vadd.f32 %v349, %v270
        %v351 = vadd.f32 %v350, %v273
        %v352 = vadd.f32 %v351, %v275
        %v353 = vadd.f32 %v352, %v278
        %v354 = vadd.f32 %v353, %v280
        %v355 = vadd.f32 %v354, %v283
        %v356 = vadd.f32 %v355, %v285
        %v357 = vadd.f32 %v356, %v288
        %v358 = vadd.f32 %v357, %v290
        %v359 = vadd.f32 %v358, %v293
        %v360 = vadd.f32 %v359, %v295
        %v361 = vrot.slane %v360, 4
        %v362 = vadd.f32 %v360, %v361
        %v363 = vrot.slane %v362, 2
        %v364 = vadd.f32 %v362, %v363
        %v365 = vrot.slane %v364, 1
        %v366 = vadd.f32 %v364, %v365
        %v367 = vadd.f32 %v307, %v309
        %v368 = vadd.f32 %v367, %v312
        %v369 = vadd.f32 %v368, %v314
        %v370 = vadd.f32 %v369, %v317
        %v371 = vadd.f32 %v370, %v319
        %v372 = vadd.f32 %v371, %v322
        %v373 = vadd.f32 %v372, %v324
        %v374 = vadd.f32 %v373, %v327
        %v375 = vadd.f32 %v374, %v329
        %v376 = vadd.f32 %v375, %v332
        %v377 = vadd.f32 %v376, %v334
        %v378 = vadd.f32 %v377, %v337
        %v379 = vadd.f32 %v378, %v339
        %v380 = vadd.f32 %v379, %v342
        %v381 = vadd.f32 %v380, %v344
        %v382 = vrot.slane %v381, 4
        %v383 = vadd.f32 %v381, %v382
        %v384 = vrot.slane %v383, 2
        %v385 = vadd.f32 %v383, %v384
        %v386 = vrot.slane %v385, 1
        %v387 = vadd.f32 %v385, %v386
        %v388 = vmul.f32 %v258, %v258
        %v389 = vmul.f32 %v307, %v307
        %v390 = vmul.f32 %v260, %v260
        %v391 = vmul.f32 %v309, %v309
        %v392 = vmul.f32 %v263, %v263
        %v393 = vmul.f32 %v312, %v312
        %v394 = vmul.f32 %v265, %v265
        %v395 = vmul.f32 %v314, %v314
        %v396 = vmul.f32 %v268, %v268
        %v397 = vmul.f32 %v317, %v317
        %v398 = vmul.f32 %v270, %v270
        %v399 = vmul.f32 %v319, %v319
        %v400 = vmul.f32 %v273, %v273
        %v401 = vmul.f32 %v322, %v322
        %v402 = vmul.f32 %v275, %v275
        %v403 = vmul.f32 %v324, %v324
        %v404 = vmul.f32 %v278, %v278
        %v405 = vmul.f32 %v327, %v327
        %v406 = vmul.f32 %v280, %v280
        %v407 = vmul.f32 %v329, %v329
        %v408 = vmul.f32 %v283, %v283
        %v409 = vmul.f32 %v332, %v332
        %v410 = vmul.f32 %v285, %v285
        %v411 = vmul.f32 %v334, %v334
        %v412 = vmul.f32 %v288, %v288
        %v413 = vmul.f32 %v337, %v337
        %v414 = vmul.f32 %v290, %v290
        %v415 = vmul.f32 %v339, %v339
        %v416 = vmul.f32 %v293, %v293
        %v417 = vmul.f32 %v342, %v342
        %v418 = vmul.f32 %v295, %v295
        %v419 = vmul.f32 %v344, %v344
        %v420 = vadd.f32 %v388, %v390
        %v421 = vadd.f32 %v420, %v392
        %v422 = vadd.f32 %v421, %v394
        %v423 = vadd.f32 %v422, %v396
        %v424 = vadd.f32 %v423, %v398
        %v425 = vadd.f32 %v424, %v400
        %v426 = vadd.f32 %v425, %v402
        %v427 = vadd.f32 %v426, %v404
        %v428 = vadd.f32 %v427, %v406
        %v429 = vadd.f32 %v428, %v408
        %v430 = vadd.f32 %v429, %v410
        %v431 = vadd.f32 %v430, %v412
        %v432 = vadd.f32 %v431, %v414
        %v433 = vadd.f32 %v432, %v416
        %v434 = vadd.f32 %v433, %v418
        %v435 = vrot.slane %v434, 4
        %v436 = vadd.f32 %v434, %v435
        %v437 = vrot.slane %v436, 2
        %v438 = vadd.f32 %v436, %v437
        %v439 = vrot.slane %v438, 1
        %v440 = vadd.f32 %v438, %v439
        %v441 = vadd.f32 %v389, %v391
        %v442 = vadd.f32 %v441, %v393
        %v443 = vadd.f32 %v442, %v395
        %v444 = vadd.f32 %v443, %v397
        %v445 = vadd.f32 %v444, %v399
        %v446 = vadd.f32 %v445, %v401
        %v447 = vadd.f32 %v446, %v403
        %v448 = vadd.f32 %v447, %v405
        %v449 = vadd.f32 %v448, %v407
        %v450 = vadd.f32 %v449, %v409
        %v451 = vadd.f32 %v450, %v411
        %v452 = vadd.f32 %v451, %v413
        %v453 = vadd.f32 %v452, %v415
        %v454 = vadd.f32 %v453, %v417
        %v455 = vadd.f32 %v454, %v419
        %v456 = vrot.slane %v455, 4
        %v457 = vadd.f32 %v455, %v456
        %v458 = vrot.slane %v457, 2
        %v459 = vadd.f32 %v457, %v458
        %v460 = vrot.slane %v459, 1
        %v461 = vadd.f32 %v459, %v460
        %v462 = vmul.f32 %v366, 0.0078125
        %v463 = vmul.f32 %v387, 0.0078125
        %v464 = vmul.f32 %v440, 0.0078125
        %v465 = vmul.f32 %v461, 0.0078125
        %v466 = vmul.f32 %v462, %v462
        %v467 = vmul.f32 %v463, %v463
        %v468 = vsub.f32 %v464, %v466
        %v469 = vsub.f32 %v465, %v467
        %v470 = vmax.f32 %v468, 0.0
        %v471 = vmax.f32 %v469, 0.0
        %v472 = vsub.f32 %v258, %v462
        %v473 = vsub.f32 %v307, %v463
        %v474 = vsub.f32 %v260, %v462
        %v475 = vsub.f32 %v309, %v463
        %v476 = vsub.f32 %v263, %v462
        %v477 = vsub.f32 %v312, %v463
        %v478 = vsub.f32 %v265, %v462
        %v479 = vsub.f32 %v314, %v463
        %v480 = vsub.f32 %v268, %v462
        %v481 = vsub.f32 %v317, %v463
        %v482 = vsub.f32 %v270, %v462
        %v483 = vsub.f32 %v319, %v463
        %v484 = vsub.f32 %v273, %v462
        %v485 = vsub.f32 %v322, %v463
        %v486 = vsub.f32 %v275, %v462
        %v487 = vsub.f32 %v324, %v463
        %v488 = vsub.f32 %v278, %v462
        %v489 = vsub.f32 %v327, %v463
        %v490 = vsub.f32 %v280, %v462
        %v491 = vsub.f32 %v329, %v463
        %v492 = vsub.f32 %v283, %v462
        %v493 = vsub.f32 %v332, %v463
        %v494 = vsub.f32 %v285, %v462
        %v495 = vsub.f32 %v334, %v463
        %v496 = vsub.f32 %v288, %v462
        %v497 = vsub.f32 %v337, %v463
        %v498 = vsub.f32 %v290, %v462
        %v499 = vsub.f32 %v339, %v463
        %v500 = vsub.f32 %v293, %v462
        %v501 = vsub.f32 %v342, %v463
        %v502 = vsub.f32 %v295, %v462
        %v503 = vsub.f32 %v344, %v463
        %v504 = vadd.f32 %v470, 1e-05
        %v505 = vadd.f32 %v471, 1e-05
        %v506 = vrsqrt.pop %v504
        %v507 = vmul.f32 %v506, %v504
        %v508 = vmul.f32 %v507, %v506
        %v509 = vmul.f32 0.5, %v508
        %v510 = vsub.f32 1.5, %v509
        %v511 = vmul.f32 %v506, %v510
        %vm512 = vweird.f32 %v504
        %vm513 = vweird.f32 %v506
        %vm514 = vmor %vm512, %vm513
        %v515 = vsel %vm514, %v506, %v511
        %v516 = vrsqrt.pop %v505
        %v517 = vmul.f32 %v516, %v505
        %v518 = vmul.f32 %v517, %v516
        %v519 = vmul.f32 0.5, %v518
        %v520 = vsub.f32 1.5, %v519
        %v521 = vmul.f32 %v516, %v520
        %vm522 = vweird.f32 %v505
        %vm523 = vweird.f32 %v516
        %vm524 = vmor %vm522, %vm523
        %v525 = vsel %vm524, %v516, %v521
        %v526 = vmul.f32 %v472, %v515
        %v527 = vmul.f32 %v473, %v525
        %v528 = vmul.f32 %v474, %v515
        %v529 = vmul.f32 %v475, %v525
        %v530 = vmul.f32 %v476, %v515
        %v531 = vmul.f32 %v477, %v525
        %v532 = vmul.f32 %v478, %v515
        %v533 = vmul.f32 %v479, %v525
        %v534 = vmul.f32 %v480, %v515
        %v535 = vmul.f32 %v481, %v525
        %v536 = vmul.f32 %v482, %v515
        %v537 = vmul.f32 %v483, %v525
        %v538 = vmul.f32 %v484, %v515
        %v539 = vmul.f32 %v485, %v525
        %v540 = vmul.f32 %v486, %v515
        %v541 = vmul.f32 %v487, %v525
        %v542 = vmul.f32 %v488, %v515
        %v543 = vmul.f32 %v489, %v525
        %v544 = vmul.f32 %v490, %v515
        %v545 = vmul.f32 %v491, %v525
        %v546 = vmul.f32 %v492, %v515
        %v547 = vmul.f32 %v493, %v525
        %v548 = vmul.f32 %v494, %v515
        %v549 = vmul.f32 %v495, %v525
        %v550 = vmul.f32 %v496, %v515
        %v551 = vmul.f32 %v497, %v525
        %v552 = vmul.f32 %v498, %v515
        %v553 = vmul.f32 %v499, %v525
        %v554 = vmul.f32 %v500, %v515
        %v555 = vmul.f32 %v501, %v525
        %v556 = vmul.f32 %v502, %v515
        %v557 = vmul.f32 %v503, %v525
        %v558 = vtanh.pop %v526
        %v559 = vtanh.pop %v527
        %v560 = vtanh.pop %v528
        %v561 = vtanh.pop %v529
        %v562 = vtanh.pop %v530
        %v563 = vtanh.pop %v531
        %v564 = vtanh.pop %v532
        %v565 = vtanh.pop %v533
        %v566 = vtanh.pop %v534
        %v567 = vtanh.pop %v535
        %v568 = vtanh.pop %v536
        %v569 = vtanh.pop %v537
        %v570 = vtanh.pop %v538
        %v571 = vtanh.pop %v539
        %v572 = vtanh.pop %v540
        %v573 = vtanh.pop %v541
        %v574 = vtanh.pop %v542
        %v575 = vtanh.pop %v543
        %v576 = vtanh.pop %v544
        %v577 = vtanh.pop %v545
        %v578 = vtanh.pop %v546
        %v579 = vtanh.pop %v547
        %v580 = vtanh.pop %v548
        %v581 = vtanh.pop %v549
        %v582 = vtanh.pop %v550
        %v583 = vtanh.pop %v551
        %v584 = vtanh.pop %v552
        %v585 = vtanh.pop %v553
        %v586 = vtanh.pop %v554
        %v587 = vtanh.pop %v555
        %v588 = vtanh.pop %v556
        %v589 = vtanh.pop %v557
        %590 = vst [vmem:[%s136] sm:$0xff] %v558
        %591 = vst [vmem:[%s136 + $0x8] sm:$0xff] %v559
        %592 = vst [vmem:[%s136 + $0x10] sm:$0xff] %v560
        %593 = vst [vmem:[%s136 + $0x18] sm:$0xff] %v561
        %594 = vst [vmem:[%s136 + $0x20] sm:$0xff] %v562
        %595 = vst [vmem:[%s136 + $0x28] sm:$0xff] %v563
        %596 = vst [vmem:[%s136 + $0x30] sm:$0xff] %v564
        %597 = vst [vmem:[%s136 + $0x38] sm:$0xff] %v565
        %598 = vst [vmem:[%s136 + $0x40] sm:$0xff] %v566
        %599 = vst [vmem:[%s136 + $0x48] sm:$0xff] %v567
        %600 = vst [vmem:[%s136 + $0x50] sm:$0xff] %v568
        %601 = vst [vmem:[%s136 + $0x58] sm:$0xff] %v569
        %602 = vst [vmem:[%s136 + $0x60] sm:$0xff] %v570
        %603 = vst [vmem:[%s136 + $0x68] sm:$0xff] %v571
        %604 = vst [vmem:[%s136 + $0x70] sm:$0xff] %v572
        %605 = vst [vmem:[%s136 + $0x78] sm:$0xff] %v573
        %606 = vst [vmem:[%s136 + $0x80] sm:$0xff] %v574
        %607 = vst [vmem:[%s136 + $0x88] sm:$0xff] %v575
        %608 = vst [vmem:[%s136 + $0x90] sm:$0xff] %v576
        %609 = vst [vmem:[%s136 + $0x98] sm:$0xff] %v577
        %610 = vst [vmem:[%s136 + $0xa0] sm:$0xff] %v578
        %611 = vst [vmem:[%s136 + $0xa8] sm:$0xff] %v579
        %612 = vst [vmem:[%s136 + $0xb0] sm:$0xff] %v580
        %613 = vst [vmem:[%s136 + $0xb8] sm:$0xff] %v581
        %614 = vst [vmem:[%s136 + $0xc0] sm:$0xff] %v582
        %615 = vst [vmem:[%s136 + $0xc8] sm:$0xff] %v583
        %616 = vst [vmem:[%s136 + $0xd0] sm:$0xff] %v584
        %617 = vst [vmem:[%s136 + $0xd8] sm:$0xff] %v585
        %618 = vst [vmem:[%s136 + $0xe0] sm:$0xff] %v586
        %619 = vst [vmem:[%s136 + $0xe8] sm:$0xff] %v587
        %620 = vst [vmem:[%s136 + $0xf0] sm:$0xff] %v588
        %621 = vst [vmem:[%s136 + $0xf8] sm:$0xff] %v589
        %s622 = sand.u32 %s71, 1
        %s623 = scalar_lea.sflag [#allocation3], %s622
        %s624 = sand.u32 %s71, 1
        %s625 = smul.addr %s624, 256
        %s626 = scalar_lea.vmem [#allocation2], %s625
        // Predicated region
        $region29: #{transform_net_forward.1} parent=27 // pred_check
          %p627 = pneg %p81
        $region30: #{transform_net_forward.1} parent=27 // pred_check_branch
          %629 = sbr.rel (%p627) target = $region32
        $region31: #{transform_net_forward.1} parent=27 // pred_region
          %631 = vsyncadd %s623, 0
          %s632 = smul.addr %s16, 32
          %s633 = smul.addr %s632, 8
          %s634 = scalar_lea.hbm %s2, %s633
          %s635 = sshll.u32 %s626, 4
          %s636 = int_to_ptr.vmem [resolvable:$true] %s635
          %s637 = sshll.u32 %s634, 4
          %s638 = int_to_ptr.hbm [resolvable:$true] %s637
          %643 = dma.vmem_to_hbm [thread:$0]  %s636, 4096, %s638, %s623, 256, 256, 16
        $region32: #{transform_net_forward.1} parent=27 // pred_fallthru
          _
      $region28: #{transform_net_forward.1} parent=5 // pred_fallthru
        _
      %p644 = scmp.le.s32.totalorder 2, %s11
      // Predicated region
      $region33: #{transform_net_forward.1} parent=5 // pred_check
        %p645 = pneg %p644
      $region34: #{transform_net_forward.1} parent=5 // pred_check_branch
        %647 = sbr.rel (%p645) target = $region36
      $region35: #{transform_net_forward.1} parent=5 // pred_region
        %s648 = ssub.s32 %s11, 2
        // Predicated region
        $region37: #{transform_net_forward.1} parent=35 // pred_check
          %p649 = pneg %p87
        $region38: #{transform_net_forward.1} parent=35 // pred_check_branch
          %651 = sbr.rel (%p649) target = $region40
        $region39: #{transform_net_forward.1} parent=35 // pred_region
          %s652 = sand.u32 %s72, 1
          %s653 = scalar_lea.sflag [#allocation3], %s652
          %s654 = sand.u32 %s72, 1
          %s655 = smul.addr %s654, 256
          %s656 = scalar_lea.vmem [#allocation2], %s655
          %658 = dma.done %s653, 4096
        $region40: #{transform_net_forward.1} parent=35 // pred_fallthru
          _
      $region36: #{transform_net_forward.1} parent=5 // pred_fallthru
        _
    $region6: #{transform_net_forward.1} parent=1 // loop_footer
      %s15 = sadd.s32 1, %s11
    $region7: #{transform_net_forward.1} parent=1 // loop_footer_branch
      %10 = sbr.rel target = $region3
    $region8: #{transform_net_forward.1} parent=1 // loop_exit
      _
    %659 = vsyncpa [#allocation3], 1
    %s660 = scalar_lea.sflag [#allocation3], 1
    %661 = vsyncpa %s660, 1

</llo_original>
